<compile_context>
chip_gen: v5e
topology: v5e:2x2
jax: 0.10.0
libtpu: 0.0.40
codegen_flags: <defaults>
</compile_context>

<pallas_src>
import functools
import math

import jax
import jax.numpy as jnp
from jax.experimental import pallas as pl
from jax.experimental.pallas import tpu as pltpu


# ---------------------------------------------------------------------------
# Parameter / buffer construction (mirrors PositionalEncoding.__init__)
# ---------------------------------------------------------------------------
def make_pe_table(d_model: int, max_len: int = 5000, dtype=jnp.float32) -> jnp.ndarray:
    """Returns pe of shape (max_len, d_model) (lane-dense 2-D layout)."""
    assert d_model % 2 == 0, "d_model must be even (same constraint as the PyTorch code)"
    position = jnp.arange(0, max_len, dtype=jnp.float32)[:, None]            # (L, 1)
    div_term = jnp.exp(
        jnp.arange(0, d_model, 2, dtype=jnp.float32) * (-math.log(10000.0) / d_model)
    )                                                                        # (D/2,)
    angles = position * div_term                                             # (L, D/2)
    pe = jnp.zeros((max_len, d_model), dtype=jnp.float32)
    pe = pe.at[:, 0::2].set(jnp.sin(angles))
    pe = pe.at[:, 1::2].set(jnp.cos(angles))
    return pe.astype(dtype)                                                  # (L, D)


# ---------------------------------------------------------------------------
# Helpers
# ---------------------------------------------------------------------------
def _broadcast_pe(pe_blk, batch: int):
    # pe_blk: (tile_s, D) -> (tile_s, B*D) matching the flattened (S, B*D)
    # activation layout (column b*D + d needs pe[:, d]).
    if batch == 1:
        return pe_blk
    return jnp.concatenate([pe_blk] * batch, axis=-1)


def _dropout_threshold(p: float) -> int:
    # keep iff uint32 random bits < threshold, P(keep) = 1 - p.
    return min(int(round((1.0 - p) * 4294967296.0)), 4294967295)


def _choose_tile_s(S: int, row_bytes: int, target_bytes: int = 1 << 20) -> int:
    """Sequence rows per block: ~1 MiB per input buffer, multiple of 8."""
    if S <= 8 or S * row_bytes <= target_bytes:
        return S
    t = max(8, (target_bytes // max(row_bytes, 1)) // 8 * 8)
    return min(t, S)


# ---------------------------------------------------------------------------
# Pallas kernels (operate on the flattened (tile_s, B*D) view)
# ---------------------------------------------------------------------------
def _pe_add_kernel(x_ref, pe_ref, o_ref, *, batch):
    pe_bd = _broadcast_pe(pe_ref[...], batch).astype(x_ref.dtype)
    o_ref[...] = x_ref[...] + pe_bd


def _pe_add_dropout_kernel(x_ref, pe_ref, bits_ref, o_ref, *, batch, keep_threshold, scale):
    pe_bd = _broadcast_pe(pe_ref[...], batch).astype(x_ref.dtype)
    y = x_ref[...] + pe_bd
    keep = bits_ref[...] < jnp.uint32(keep_threshold)          # integer-threshold compare
    o_ref[...] = jnp.where(keep, y * jnp.asarray(scale, dtype=y.dtype), jnp.zeros_like(y))


# ---------------------------------------------------------------------------
# Wrapper
# ---------------------------------------------------------------------------
def positional_encoding_forward(x, pe, *, dropout_p=0.1, training=False, key=None):
    """x: (S, B, D).  pe: (max_len, D), same positional-encoding table for all batches.

    Note: for very small S*B*D a plain fused `x + pe` in XLA beats the custom
    call overhead; the Pallas path is kept unconditional here so the demo
    exercises the kernel.
    """
    S, B, D = x.shape
    max_len, Dp = pe.shape
    assert Dp == D and S <= max_len

    pe = pe.astype(x.dtype)                    # keep PE stream in activation dtype
    x2 = x.reshape(S, B * D)                   # free reshape (merges trailing contiguous dims)

    tile_s = _choose_tile_s(S, B * D * x.dtype.itemsize)
    grid = (pl.cdiv(S, tile_s),)

    x_spec = pl.BlockSpec((tile_s, B * D), lambda i: (i, 0))
    pe_spec = pl.BlockSpec((tile_s, D), lambda i: (i, 0))      # indexes the FULL pe table; no slice op
    out_spec = pl.BlockSpec((tile_s, B * D), lambda i: (i, 0))
    out_shape = jax.ShapeDtypeStruct((S, B * D), x.dtype)
    cparams = pltpu.CompilerParams(dimension_semantics=("parallel",))

    if (not training) or dropout_p == 0.0:
        out2 = pl.pallas_call(
            functools.partial(_pe_add_kernel, batch=B),
            out_shape=out_shape,
            grid=grid,
            in_specs=[x_spec, pe_spec],
            out_specs=out_spec,
            compiler_params=cparams,
        )(x2, pe)
        return out2.reshape(S, B, D)

    if dropout_p >= 1.0:                       # guard: 1/(1-p) would be inf; torch returns zeros
        return jnp.zeros_like(x)
    if key is None:
        raise ValueError("training=True with dropout_p>0 requires a PRNG key")

    # TODO(synk): on real TPU hardware the mask could be generated in-kernel with
    # pltpu.prng_seed/prng_random_bits (dropping this extra HBM stream), but those
    # primitives do not lower in interpret/CPU mode, so bits are passed in instead.
    bits = jax.random.bits(key, (S, B * D), dtype=jnp.uint32)
    keep_threshold = _dropout_threshold(dropout_p)
    scale = 1.0 / (1.0 - dropout_p)

    out2 = pl.pallas_call(
        functools.partial(
            _pe_add_dropout_kernel, batch=B, keep_threshold=keep_threshold, scale=scale
        ),
        out_shape=out_shape,
        grid=grid,
        in_specs=[x_spec, pe_spec, x_spec],    # bits share x's block layout
        out_specs=out_spec,
        compiler_params=cparams,
    )(x2, pe, bits)
    return out2.reshape(S, B, D)


# ---------------------------------------------------------------------------
# Main
# ---------------------------------------------------------------------------
if __name__ == "__main__":
    d_model = 32
    seq_len = 8
    batch = 2
    max_len = 64                                # small max_len is enough for the test

    pe = make_pe_table(d_model, max_len)

    root = jax.random.PRNGKey(0)
    kx, kdrop = jax.random.split(root)
    x = jax.random.normal(kx, (seq_len, batch, d_model), dtype=jnp.float32)

    # ----- Eval-mode forward (dropout == identity): matches module in .eval() ----
    out = positional_encoding_forward(x, pe, dropout_p=0.1, training=False)
    out = jax.block_until_ready(out)
    ref = x + pe[:seq_len][:, None, :]
    assert jnp.allclose(out, ref, atol=1e-6), "eval-path mismatch vs reference"

    # ----- Training-mode forward (inverted dropout, p=0.1) ----------------------
    # TODO(synk): PyTorch's dropout RNG stream cannot be reproduced bit-exactly;
    # inverted-dropout semantics with p=0.1 are preserved instead.
    p = 0.1
    out_t = positional_encoding_forward(x, pe, dropout_p=p, training=True, key=kdrop)
    out_t = jax.block_until_ready(out_t)

    # Exact reference for the training path (same bits / threshold as the wrapper).
    bits_ref = jax.random.bits(kdrop, (seq_len, batch * d_model), dtype=jnp.uint32)
    keep_ref = (bits_ref < jnp.uint32(_dropout_threshold(p))).reshape(seq_len, batch, d_model)
    ref_t = jnp.where(keep_ref, ref / (1.0 - p), 0.0)
    assert jnp.allclose(out_t, ref_t, atol=1e-5), "train-path mismatch vs reference"

    print("KERNEL_OK")
</pallas_src>

<mosaic_0001>
module attributes {stable_mosaic.version = 11 : i64} {
  func.func @_pe_add_kernel(%arg0: i32, %arg1: memref<8x64xf32, #tpu.memory_space<vmem>>, %arg2: memref<8x32xf32, #tpu.memory_space<vmem>>, %arg3: memref<8x64xf32, #tpu.memory_space<vmem>>) attributes {dimension_semantics = [#tpu.dimension_semantics<parallel>], iteration_bounds = array<i64: 1>, scalar_prefetch = 0 : i64, scratch_operands = 0 : i64, tpu.core_type = #tpu.core_type<tc>, window_params = [{transform_indices = @transform_0, window_bounds = array<i64: 8, 64>}, {transform_indices = @transform_1, window_bounds = array<i64: 8, 32>}, {transform_indices = @transform_2, window_bounds = array<i64: 8, 64>}]} {
    %c0 = arith.constant 0 : index
    %c0_0 = arith.constant 0 : index
    %0 = vector.load %arg2[%c0, %c0_0] : memref<8x32xf32, #tpu.memory_space<vmem>>, vector<8x32xf32>
    %1 = tpu.concatenate %0, %0 in 1 : vector<8x32xf32>, vector<8x32xf32> -> vector<8x64xf32>
    %c0_1 = arith.constant 0 : index
    %c0_2 = arith.constant 0 : index
    %2 = vector.load %arg1[%c0_1, %c0_2] : memref<8x64xf32, #tpu.memory_space<vmem>>, vector<8x64xf32>
    %3 = arith.addf %2, %1 : vector<8x64xf32>
    %c0_3 = arith.constant 0 : index
    %c0_4 = arith.constant 0 : index
    %4 = vector.load %arg3[%c0_3, %c0_4] : memref<8x64xf32, #tpu.memory_space<vmem>>, vector<8x64xf32>
    tpu.vector_store %arg3[%c0_3, %c0_4], %3 {strides = array<i32>} : memref<8x64xf32, #tpu.memory_space<vmem>>, vector<8x64xf32>,
    return
  }
  func.func @transform_0(%arg0: i32) -> (i32, i32) {
    %c0_i32 = arith.constant 0 : i32
    %c0_i32_0 = arith.constant 0 : i32
    return %arg0, %c0_i32 : i32, i32
  }
  func.func @transform_1(%arg0: i32) -> (i32, i32) {
    %c0_i32 = arith.constant 0 : i32
    %c0_i32_0 = arith.constant 0 : i32
    return %arg0, %c0_i32 : i32, i32
  }
  func.func @transform_2(%arg0: i32) -> (i32, i32) {
    %c0_i32 = arith.constant 0 : i32
    %c0_i32_0 = arith.constant 0 : i32
    return %arg0, %c0_i32 : i32, i32
  }
}

</mosaic_0001>

<llo_original>
// kernel: tpu_custom_call.1
$region0: #{tpu_custom_call.1}
  #allocation0 [shape = 'u32[]', space=smem, size = 0x4, offset = 0x4, fixed_abs, tag = 'smem constant byte address 0x4 - core index']
  #allocation1 [shape = 'u32[72,128]{1,0:T(1,128)}', space=vmem, size = 0x9000, scoped, tag = 'internal scratch']
  %s0 = inlined_call_operand.vmem [shape: f32[8,64], index: 0, kind: input, shape index: {}]
  %s1 = inlined_call_operand.vmem [shape: f32[64,32], index: 1, kind: input, shape index: {}]
  %s2 = inlined_call_operand.hbm [shape: f32[8,64], index: 2, kind: output, shape index: {}]
  %s3 = sld [smem:[#allocation0]]
  $region18: #{tpu_custom_call.1} parent=0
    _
  %s5 = ssub.s32 1, %s3
  %s6 = scalar_select 0, %s5, %s3
  $region1: #{tpu_custom_call.1} parent=0
    #allocation2 [shape = 'u8[4096]{0}', space=vmem, size = 0x1000, scoped, tag = 'output window, operand 0, single buffered']
    #allocation3 [shape = 's32[1]{0}', space=sflag, size = 0x4, scoped, tag = 'scoped memory for tpu_custom_call.1']
    %7 = vsyncpa [#allocation3], 0
    // Predicated region
    $region2: #{tpu_custom_call.1} parent=1 // pred_check
      _
    $region3: #{tpu_custom_call.1} parent=1 // pred_check_branch
      %9 = sbr.rel (0) target = $region5
    $region4: #{tpu_custom_call.1} parent=1 // pred_region
      _
    $region5: #{tpu_custom_call.1} parent=1 // pred_fallthru
      _
    // Predicated region
    $region6: #{tpu_custom_call.1} parent=1 // pred_check
      _
    $region7: #{tpu_custom_call.1} parent=1 // pred_check_branch
      %11 = sbr.rel (0) target = $region9
    $region8: #{tpu_custom_call.1} parent=1 // pred_region
      _
    $region9: #{tpu_custom_call.1} parent=1 // pred_fallthru
      _
    %v12 = vld [vmem:[%s1] sm:$0xff]
    %14 = vrot.lane.b32.xlu0 %v12, 32
    %v15 = vpop.permute.xlu0 %14
    %vm17 = vcmask 261120
    %v18 = vsel %vm17, %v12, %v15
    %v19 = vld [vmem:[%s0] sm:$0xff]
    %v20 = vadd.f32 %v19, %v18
    %vm21 = vcmask 523264
    %22 = vst.msk [vmem:[#allocation2] sm:$0xff] %vm21, %v20
    // Predicated region
    $region10: #{tpu_custom_call.1} parent=1 // pred_check
      _
    $region11: #{tpu_custom_call.1} parent=1 // pred_check_branch
      %24 = sbr.rel (0) target = $region13
    $region12: #{tpu_custom_call.1} parent=1 // pred_region
      %26 = vsyncadd [#allocation3], 0
      %s28 = sshll.u32 [#allocation2], 4
      %s29 = int_to_ptr.vmem [resolvable:$true] %s28
      %s30 = sshll.u32 %s2, 4
      %s31 = int_to_ptr.hbm [resolvable:$true] %s30
      %33 = dma.vmem_to_hbm [thread:$0]  %s29, 128, %s31, [#allocation3]
    $region13: #{tpu_custom_call.1} parent=1 // pred_fallthru
      _
    // Predicated region
    $region14: #{tpu_custom_call.1} parent=1 // pred_check
      _
    $region15: #{tpu_custom_call.1} parent=1 // pred_check_branch
      %35 = sbr.rel (0) target = $region17
    $region16: #{tpu_custom_call.1} parent=1 // pred_region
      %37 = dma.done [#allocation3], 128
    $region17: #{tpu_custom_call.1} parent=1 // pred_fallthru
      _
    %38 = vsyncpa [#allocation3], 1

</llo_original>
